<compile_context>
chip_gen: v7x
topology: tpu7x:2x2x1
jax: 0.10.0
libtpu: 0.0.40
codegen_flags: <defaults>
</compile_context>

<pallas_src>
import functools

import jax
import jax.numpy as jnp
from jax.experimental import pallas as pl
from jax.experimental.pallas import tpu as pltpu


def _cdiv(a, b):
    return (a + b - 1) // b


def _round_up(n, m):
    return _cdiv(n, m) * m


def _vmem_limit_bytes():
    """~3/4 of physical VMEM, capped at 96 MiB (=> ~48 MiB on v7x, 96 MiB on v5e/v6e)."""
    try:
        cap = pltpu.get_tpu_info().vmem_capacity_bytes
    except Exception:  # non-TPU backend / API drift: fall back to 128 MiB class
        cap = 128 * 1024 * 1024
    return int(min(96 * 1024 * 1024, (cap * 3) // 4))


def _mlp_kernel(x_ref, w1_ref, b1_ref, w2_ref, b2_ref, o_ref):
    # fc1 on the MXU (operands f32 or bf16), f32 accumulate.
    h = jnp.dot(x_ref[...], w1_ref[...], preferred_element_type=jnp.float32)
    # Bias add + ReLU in f32 on the VPU, once per batch tile.
    h = jnp.maximum(h + b1_ref[...].astype(jnp.float32), 0.0)
    # fc2: feed activations back into the MXU in the weights' dtype, f32 accumulate.
    y = jnp.dot(h.astype(w2_ref.dtype), w2_ref[...],
                preferred_element_type=jnp.float32)
    o_ref[...] = (y + b2_ref[...].astype(jnp.float32)).astype(o_ref.dtype)


@functools.partial(jax.jit, static_argnames=("block_batch",))
def simple_rl_model_forward(x, w1, b1, w2, b2, *, block_batch=1024):
    """Pallas forward of Linear(in->hid) -> ReLU -> Linear(hid->out).

    x : (B, input_size)             w1: (input_size, hidden_size)
    b1: (hidden_size,)/(1, hidden)  w2: (hidden_size, output_size)
    b2: (output_size,)/(1, output)
    returns (B, output_size) in x.dtype.  Pass f32 for exact PyTorch parity,
    bf16 x/weights for the half-bandwidth / bf16-MXU path.
    """
    batch, in_size = x.shape
    hid = w1.shape[1]
    out = w2.shape[1]
    b1 = b1.reshape(1, hid)
    b2 = b2.reshape(1, out)

    # bf16 packs two rows per sublane -> 16-row batch granule; f32 -> 8.
    granule = 16 if x.dtype == jnp.bfloat16 else 8

    # Balanced batch tiles: avoid up-to-(tb-1) rows of over-padding, and keep
    # >= 2 tiles for medium/large batches so v7x's second TensorCore gets work
    # (no-op cost on v5e/v6e: ~0.35 us extra grid step).
    num_tiles = _cdiv(batch, block_batch)
    if num_tiles == 1 and batch >= 256:
        num_tiles = 2
    if num_tiles == 1:
        tb = batch            # full-array-dim block: exempt from (8,128), no padding
        batch_p = batch
    else:
        tb = _round_up(_cdiv(batch, num_tiles), granule)
        batch_p = _round_up(batch, tb)

    x_in = x if batch_p == batch else jnp.pad(x, ((0, batch_p - batch), (0, 0)))

    # Grid-constant operands stay VMEM-resident (index_map -> (0, 0)).  Once
    # they are big enough to matter for VMEM, single-buffer them: they are
    # never re-fetched, so the default 2 buffers only waste VMEM (critical on
    # v7x's 64 MiB).  Tiny models keep the default pipelining path.
    param_bytes = (w1.size * w1.dtype.itemsize + w2.size * w2.dtype.itemsize
                   + (b1.size + b2.size) * b1.dtype.itemsize)
    single_buffer = param_bytes >= (4 << 20)

    def _const_spec(shape):
        if single_buffer:
            return pl.BlockSpec(shape, lambda i: (0, 0),
                                pipeline_mode=pl.Buffered(1))
        return pl.BlockSpec(shape, lambda i: (0, 0))

    out_dtype = x.dtype
    xsize = jnp.dtype(x.dtype).itemsize
    cost = pl.CostEstimate(
        flops=2 * batch_p * (in_size * hid + hid * out),
        transcendentals=0,
        bytes_accessed=(batch_p * in_size * xsize                      # x
                        + w1.size * w1.dtype.itemsize                  # w1
                        + w2.size * w2.dtype.itemsize                  # w2
                        + (b1.size + b2.size) * b1.dtype.itemsize      # biases
                        + batch_p * out * jnp.dtype(out_dtype).itemsize),  # out
    )

    y = pl.pallas_call(
        _mlp_kernel,
        out_shape=jax.ShapeDtypeStruct((batch_p, out), out_dtype),
        grid=(batch_p // tb,),
        in_specs=[
            pl.BlockSpec((tb, in_size), lambda i: (i, 0)),   # x: pipelined per tile
            _const_spec((in_size, hid)),                     # params: VMEM-resident
            _const_spec((1, hid)),
            _const_spec((hid, out)),
            _const_spec((1, out)),
        ],
        out_specs=pl.BlockSpec((tb, out), lambda i: (i, 0)),
        compiler_params=pltpu.CompilerParams(
            dimension_semantics=("parallel",),   # shard batch tiles over v7x's 2 TCs
            vmem_limit_bytes=_vmem_limit_bytes(),
        ),
        cost_estimate=cost,
    )(x_in, w1, b1, w2, b2)

    return y if batch_p == batch else y[:batch]


def init_params(key, input_size=8, hidden_size=16, output_size=8):
    """nn.Linear-style U(-1/sqrt(fan_in), 1/sqrt(fan_in)) init."""
    k1, k2, k3, k4 = jax.random.split(key, 4)
    bound1 = input_size ** -0.5
    bound2 = hidden_size ** -0.5
    w1 = jax.random.uniform(k1, (input_size, hidden_size), jnp.float32, -bound1, bound1)
    b1 = jax.random.uniform(k2, (hidden_size,), jnp.float32, -bound1, bound1)
    w2 = jax.random.uniform(k3, (hidden_size, output_size), jnp.float32, -bound2, bound2)
    b2 = jax.random.uniform(k4, (output_size,), jnp.float32, -bound2, bound2)
    return w1, b1, w2, b2


if __name__ == "__main__":
    input_size, hidden_size, output_size = 8, 16, 8
    batch = 4

    key = jax.random.PRNGKey(0)
    kx, kp = jax.random.split(key)
    x = jax.random.normal(kx, (batch, input_size), jnp.float32)
    w1, b1, w2, b2 = init_params(kp, input_size, hidden_size, output_size)

    out = simple_rl_model_forward(x, w1, b1, w2, b2)
    out = jax.block_until_ready(out)
    assert out.shape == (batch, output_size)

    # Pure-f32 PyTorch-equivalent reference (kernel math is f32 end-to-end here).
    ref = jnp.maximum(x @ w1 + b1[None, :], 0.0) @ w2 + b2[None, :]
    err = jnp.max(jnp.abs(out - ref))
    assert jnp.allclose(out, ref, atol=1e-2, rtol=1e-2), f"max abs err = {err}"

    print("KERNEL_OK")
</pallas_src>

<mosaic_0001>
module attributes {stable_mosaic.version = 11 : i64} {
  func.func @_mlp_kernel(%arg0: i32, %arg1: memref<4x8xf32, #tpu.memory_space<vmem>>, %arg2: memref<8x16xf32, #tpu.memory_space<vmem>>, %arg3: memref<1x16xf32, #tpu.memory_space<vmem>>, %arg4: memref<16x8xf32, #tpu.memory_space<vmem>>, %arg5: memref<1x8xf32, #tpu.memory_space<vmem>>, %arg6: memref<4x8xf32, #tpu.memory_space<vmem>>) attributes {dimension_semantics = [#tpu.dimension_semantics<parallel>], iteration_bounds = array<i64: 1>, scalar_prefetch = 0 : i64, scratch_operands = 0 : i64, tpu.core_type = #tpu.core_type<tc>, window_params = [{transform_indices = @transform_0, window_bounds = array<i64: 4, 8>}, {pipeline_mode = #tpu.pipeline_mode<synchronous>, transform_indices = @transform_1, window_bounds = array<i64: 8, 16>}, {pipeline_mode = #tpu.pipeline_mode<synchronous>, transform_indices = @transform_2, window_bounds = array<i64: 1, 16>}, {pipeline_mode = #tpu.pipeline_mode<synchronous>, transform_indices = @transform_3, window_bounds = array<i64: 16, 8>}, {pipeline_mode = #tpu.pipeline_mode<synchronous>, transform_indices = @transform_4, window_bounds = array<i64: 1, 8>}, {transform_indices = @transform_5, window_bounds = array<i64: 4, 8>}]} {
    %c0 = arith.constant 0 : index
    %c0_0 = arith.constant 0 : index
    %0 = vector.load %arg1[%c0, %c0_0] : memref<4x8xf32, #tpu.memory_space<vmem>>, vector<4x8xf32>
    %c0_1 = arith.constant 0 : index
    %c0_2 = arith.constant 0 : index
    %1 = vector.load %arg2[%c0_1, %c0_2] : memref<8x16xf32, #tpu.memory_space<vmem>>, vector<8x16xf32>
    %cst = arith.constant dense<0.000000e+00> : vector<4x16xf32>
    %2 = tpu.matmul %0, %1, %cst {dimension_numbers = #tpu.dot_dimension_numbers<[1], [0], [0], [1], [0, 0, 1, 1], [], []>} : vector<4x8xf32>, vector<8x16xf32>, vector<4x16xf32> -> vector<4x16xf32>
    %c0_3 = arith.constant 0 : index
    %c0_4 = arith.constant 0 : index
    %3 = vector.load %arg3[%c0_3, %c0_4] : memref<1x16xf32, #tpu.memory_space<vmem>>, vector<1x16xf32>
    %4 = vector.broadcast %3 : vector<1x16xf32> to vector<4x16xf32>
    %5 = arith.addf %2, %4 : vector<4x16xf32>
    %cst_5 = arith.constant 0.000000e+00 : f32
    %6 = vector.broadcast %cst_5 : f32 to vector<4x16xf32>
    %7 = arith.maximumf %5, %6 : vector<4x16xf32>
    %c0_6 = arith.constant 0 : index
    %c0_7 = arith.constant 0 : index
    %8 = vector.load %arg4[%c0_6, %c0_7] : memref<16x8xf32, #tpu.memory_space<vmem>>, vector<16x8xf32>
    %cst_8 = arith.constant dense<0.000000e+00> : vector<4x8xf32>
    %9 = tpu.matmul %7, %8, %cst_8 {dimension_numbers = #tpu.dot_dimension_numbers<[1], [0], [0], [1], [0, 0, 1, 1], [], []>} : vector<4x16xf32>, vector<16x8xf32>, vector<4x8xf32> -> vector<4x8xf32>
    %c0_9 = arith.constant 0 : index
    %c0_10 = arith.constant 0 : index
    %10 = vector.load %arg5[%c0_9, %c0_10] : memref<1x8xf32, #tpu.memory_space<vmem>>, vector<1x8xf32>
    %11 = vector.broadcast %10 : vector<1x8xf32> to vector<4x8xf32>
    %12 = arith.addf %9, %11 : vector<4x8xf32>
    %c0_11 = arith.constant 0 : index
    %c0_12 = arith.constant 0 : index
    %13 = vector.load %arg6[%c0_11, %c0_12] : memref<4x8xf32, #tpu.memory_space<vmem>>, vector<4x8xf32>
    tpu.vector_store %arg6[%c0_11, %c0_12], %12 {strides = array<i32>} : memref<4x8xf32, #tpu.memory_space<vmem>>, vector<4x8xf32>,
    return
  }
  func.func @transform_0(%arg0: i32) -> (i32, i32) {
    %c0_i32 = arith.constant 0 : i32
    %c0_i32_0 = arith.constant 0 : i32
    return %arg0, %c0_i32 : i32, i32
  }
  func.func @transform_1(%arg0: i32) -> (i32, i32) {
    %c0_i32 = arith.constant 0 : i32
    %c0_i32_0 = arith.constant 0 : i32
    %c0_i32_1 = arith.constant 0 : i32
    return %c0_i32, %c0_i32_0 : i32, i32
  }
  func.func @transform_2(%arg0: i32) -> (i32, i32) {
    %c0_i32 = arith.constant 0 : i32
    %c0_i32_0 = arith.constant 0 : i32
    %c0_i32_1 = arith.constant 0 : i32
    return %c0_i32, %c0_i32_0 : i32, i32
  }
  func.func @transform_3(%arg0: i32) -> (i32, i32) {
    %c0_i32 = arith.constant 0 : i32
    %c0_i32_0 = arith.constant 0 : i32
    %c0_i32_1 = arith.constant 0 : i32
    return %c0_i32, %c0_i32_0 : i32, i32
  }
  func.func @transform_4(%arg0: i32) -> (i32, i32) {
    %c0_i32 = arith.constant 0 : i32
    %c0_i32_0 = arith.constant 0 : i32
    %c0_i32_1 = arith.constant 0 : i32
    return %c0_i32, %c0_i32_0 : i32, i32
  }
  func.func @transform_5(%arg0: i32) -> (i32, i32) {
    %c0_i32 = arith.constant 0 : i32
    %c0_i32_0 = arith.constant 0 : i32
    return %arg0, %c0_i32 : i32, i32
  }
}

</mosaic_0001>

<llo_original>
// kernel: simple_rl_model_forward.1
$region0: #{simple_rl_model_forward.1}
  #allocation0 [shape = 'u32[]', space=smem, size = 0x4, offset = 0x4, fixed_abs, tag = 'smem constant byte address 0x4 - core index']
  #allocation1 [shape = 'u32[144,128]{1,0:T(1,128)}', space=vmem, size = 0x12000, scoped, tag = 'internal scratch']
  %s0 = inlined_call_operand.hbm [shape: f32[4,8], index: 0, kind: input, shape index: {}]
  %s1 = inlined_call_operand.hbm [shape: f32[8,16], index: 1, kind: input, shape index: {}]
  %s2 = inlined_call_operand.hbm [shape: f32[1,16], index: 2, kind: input, shape index: {}]
  %s3 = inlined_call_operand.hbm [shape: f32[16,8], index: 3, kind: input, shape index: {}]
  %s4 = inlined_call_operand.hbm [shape: f32[1,8], index: 4, kind: input, shape index: {}]
  %s5 = inlined_call_operand.hbm [shape: f32[4,8], index: 5, kind: output, shape index: {}]
  %s6 = sld [smem:[#allocation0]]
  $region50: #{simple_rl_model_forward.1} parent=0
    _
  %s8 = ssub.s32 1, %s6
  %s9 = scalar_select 0, %s8, %s6
  $region1: #{simple_rl_model_forward.1} parent=0
    #allocation2 [shape = 'u8[2048]{0}', space=vmem, size = 0x800, scoped, tag = 'input window, operand 0, single buffered']
    #allocation3 [shape = 's32[1]{0}', space=sflag, size = 0x4, scoped, tag = 'scoped memory for simple_rl_model_forward.1']
    #allocation4 [shape = 's32[1]{0}', space=sflag, size = 0x4, scoped, tag = 'scoped memory for simple_rl_model_forward.1']
    #allocation5 [shape = 'u8[4096]{0}', space=vmem, size = 0x1000, scoped, tag = 'input window, operand 1, single buffered']
    #allocation6 [shape = 's32[1]{0}', space=sflag, size = 0x4, scoped, tag = 'scoped memory for simple_rl_model_forward.1']
    #allocation7 [shape = 'u8[512]{0}', space=vmem, size = 0x400, scoped, tag = 'input window, operand 2, single buffered']
    #allocation8 [shape = 'u8[8192]{0}', space=vmem, size = 0x2000, scoped, tag = 'input window, operand 3, single buffered']
    #allocation9 [shape = 's32[1]{0}', space=sflag, size = 0x4, scoped, tag = 'scoped memory for simple_rl_model_forward.1']
    #allocation10 [shape = 'u8[512]{0}', space=vmem, size = 0x400, scoped, tag = 'input window, operand 4, single buffered']
    #allocation11 [shape = 'u8[2048]{0}', space=vmem, size = 0x800, scoped, tag = 'output window, operand 0, single buffered']
    %10 = vsyncpa [#allocation3], 0
    %11 = vsyncpa [#allocation6], 0
    %12 = vsyncpa [#allocation9], 0
    %13 = vsyncpa [#allocation4], 0
    // Predicated region
    $region2: #{simple_rl_model_forward.1} parent=1 // pred_check
      _
    $region3: #{simple_rl_model_forward.1} parent=1 // pred_check_branch
      %15 = sbr.rel (0) target = $region5
    $region4: #{simple_rl_model_forward.1} parent=1 // pred_region
      %s17 = ssub.s32 64, 64
      %18 = vsyncadd [#allocation3], %s17
      %s20 = sshll.u32 [#allocation2], 4
      %s21 = int_to_ptr.vmem [resolvable:$true] %s20
      %23 = dma.hbm_to_vmem [thread:$0]  %s0, 64, %s21, [#allocation3]
    $region5: #{simple_rl_model_forward.1} parent=1 // pred_fallthru
      _
    // Predicated region
    $region6: #{simple_rl_model_forward.1} parent=1 // pred_check
      _
    $region7: #{simple_rl_model_forward.1} parent=1 // pred_check_branch
      %25 = sbr.rel (0) target = $region9
    $region8: #{simple_rl_model_forward.1} parent=1 // pred_region
      %s27 = ssub.s32 128, 128
      %28 = vsyncadd [#allocation6], %s27
      %s30 = sshll.u32 [#allocation5], 4
      %s31 = int_to_ptr.vmem [resolvable:$true] %s30
      %33 = dma.hbm_to_vmem [thread:$0]  %s1, 128, %s31, [#allocation6]
    $region9: #{simple_rl_model_forward.1} parent=1 // pred_fallthru
      _
    // Predicated region
    $region10: #{simple_rl_model_forward.1} parent=1 // pred_check
      _
    $region11: #{simple_rl_model_forward.1} parent=1 // pred_check_branch
      %35 = sbr.rel (0) target = $region13
    $region12: #{simple_rl_model_forward.1} parent=1 // pred_region
      %s37 = ssub.s32 16, 16
      %38 = vsyncadd [#allocation6], %s37
      %s40 = sshll.u32 [#allocation7], 4
      %s41 = int_to_ptr.vmem [resolvable:$true] %s40
      %43 = dma.hbm_to_vmem [thread:$0]  %s2, 16, %s41, [#allocation6]
    $region13: #{simple_rl_model_forward.1} parent=1 // pred_fallthru
      _
    // Predicated region
    $region14: #{simple_rl_model_forward.1} parent=1 // pred_check
      _
    $region15: #{simple_rl_model_forward.1} parent=1 // pred_check_branch
      %45 = sbr.rel (0) target = $region17
    $region16: #{simple_rl_model_forward.1} parent=1 // pred_region
      %s47 = ssub.s32 256, 256
      %48 = vsyncadd [#allocation9], %s47
      %s49 = sshll.u32 [#allocation8], 4
      %s50 = int_to_ptr.vmem [resolvable:$true] %s49
      %55 = dma.hbm_to_vmem [thread:$0]  %s3, 256, %s50, [#allocation9], 128, 128, 8
    $region17: #{simple_rl_model_forward.1} parent=1 // pred_fallthru
      _
    // Predicated region
    $region18: #{simple_rl_model_forward.1} parent=1 // pred_check
      _
    $region19: #{simple_rl_model_forward.1} parent=1 // pred_check_branch
      %57 = sbr.rel (0) target = $region21
    $region20: #{simple_rl_model_forward.1} parent=1 // pred_region
      %s59 = ssub.s32 16, 16
      %60 = vsyncadd [#allocation9], %s59
      %s62 = sshll.u32 [#allocation10], 4
      %s63 = int_to_ptr.vmem [resolvable:$true] %s62
      %65 = dma.hbm_to_vmem [thread:$0]  %s4, 16, %s63, [#allocation9]
    $region21: #{simple_rl_model_forward.1} parent=1 // pred_fallthru
      _
    // Predicated region
    $region22: #{simple_rl_model_forward.1} parent=1 // pred_check
      _
    $region23: #{simple_rl_model_forward.1} parent=1 // pred_check_branch
      %67 = sbr.rel (0) target = $region25
    $region24: #{simple_rl_model_forward.1} parent=1 // pred_region
      %68 = dma.done [#allocation3], 64
    $region25: #{simple_rl_model_forward.1} parent=1 // pred_fallthru
      _
    // Predicated region
    $region26: #{simple_rl_model_forward.1} parent=1 // pred_check
      _
    $region27: #{simple_rl_model_forward.1} parent=1 // pred_check_branch
      %70 = sbr.rel (0) target = $region29
    $region28: #{simple_rl_model_forward.1} parent=1 // pred_region
      %71 = dma.done [#allocation6], 128
    $region29: #{simple_rl_model_forward.1} parent=1 // pred_fallthru
      _
    // Predicated region
    $region30: #{simple_rl_model_forward.1} parent=1 // pred_check
      _
    $region31: #{simple_rl_model_forward.1} parent=1 // pred_check_branch
      %73 = sbr.rel (0) target = $region33
    $region32: #{simple_rl_model_forward.1} parent=1 // pred_region
      %74 = dma.done [#allocation6], 16
    $region33: #{simple_rl_model_forward.1} parent=1 // pred_fallthru
      _
    // Predicated region
    $region34: #{simple_rl_model_forward.1} parent=1 // pred_check
      _
    $region35: #{simple_rl_model_forward.1} parent=1 // pred_check_branch
      %76 = sbr.rel (0) target = $region37
    $region36: #{simple_rl_model_forward.1} parent=1 // pred_region
      %77 = dma.done [#allocation9], 256
    $region37: #{simple_rl_model_forward.1} parent=1 // pred_fallthru
      _
    // Predicated region
    $region38: #{simple_rl_model_forward.1} parent=1 // pred_check
      _
    $region39: #{simple_rl_model_forward.1} parent=1 // pred_check_branch
      %79 = sbr.rel (0) target = $region41
    $region40: #{simple_rl_model_forward.1} parent=1 // pred_region
      %80 = dma.done [#allocation9], 16
    $region41: #{simple_rl_model_forward.1} parent=1 // pred_fallthru
      _
    %v81 = vld [vmem:[#allocation2] sm:$0xf]
    %v82 = vld [vmem:[#allocation5] sm:$0xff]
    %v83 = vld [vmem:[#allocation7] sm:$0x1]
    %v85 = vlaneseq
    %v86 = vshrl.u32 %v85, 7
    %v87 = vsub.s32 0, %v86
    %v88 = vrot.slane %v83, %v87
    %vm90 = vcmask 64512
    %v92 = vsel %vm90, %v81, 0
    %94 = vmatprep.subr.mxu0 0.0
    %95 = vmatpush1.msra.mxu0 %v82
    %96 = vmatprep.subr.mxu0 0.0
    %97 = vmatpush1.msra.mxu0 0.0
    %98 = vmatprep.subr.mxu0 0.0
    %99 = vmatpush1.msra.mxu0 0.0
    %100 = vmatprep.subr.mxu0 0.0
    %101 = vmatpush1.msra.mxu0 0.0
    %102 = vmatprep.subr.mxu0 0.0
    %103 = vmatpush1.msra.mxu0 0.0
    %104 = vmatprep.subr.mxu0 0.0
    %105 = vmatpush1.msra.mxu0 0.0
    %106 = vmatprep.subr.mxu0 0.0
    %107 = vmatpush1.msra.mxu0 0.0
    %108 = vmatprep.subr.mxu0 0.0
    %109 = vmatpush1.msra.mxu0 0.0
    %110 = vmatprep.subr.mxu0 0.0
    %111 = vmatpush1.msra.mxu0 0.0
    %112 = vmatprep.subr.mxu0 0.0
    %113 = vmatpush1.msra.mxu0 0.0
    %114 = vmatprep.subr.mxu0 0.0
    %115 = vmatpush1.msra.mxu0 0.0
    %116 = vmatprep.subr.mxu0 0.0
    %117 = vmatpush1.msra.mxu0 0.0
    %118 = vmatprep.subr.mxu0 0.0
    %119 = vmatpush1.msra.mxu0 0.0
    %120 = vmatprep.subr.mxu0 0.0
    %121 = vmatpush1.msra.mxu0 0.0
    %122 = vmatprep.subr.mxu0 0.0
    %123 = vmatpush1.msra.mxu0 0.0
    %124 = vmatprep.subr.mxu0 0.0
    %125 = vmatpush1.msra.mxu0 0.0
    %126 = vmatprep.subr.mxu0 0.0
    %127 = vmatpush1.msra.mxu0 0.0
    %128 = vmatprep.subr.mxu0 0.0
    %129 = vmatpush1.msra.mxu0 0.0
    %130 = vmatprep.subr.mxu0 0.0
    %131 = vmatpush1.msra.mxu0 0.0
    %132 = vmatprep.subr.mxu0 0.0
    %133 = vmatpush1.msra.mxu0 0.0
    %134 = vmatprep.subr.mxu0 0.0
    %135 = vmatpush1.msra.mxu0 0.0
    %136 = vmatprep.subr.mxu0 0.0
    %137 = vmatpush1.msra.mxu0 0.0
    %138 = vmatprep.subr.mxu0 0.0
    %139 = vmatpush1.msra.mxu0 0.0
    %140 = vmatprep.subr.mxu0 0.0
    %141 = vmatpush1.msra.mxu0 0.0
    %142 = vmatprep.subr.mxu0 0.0
    %143 = vmatpush1.msra.mxu0 0.0
    %144 = vmatprep.subr.mxu0 0.0
    %145 = vmatpush1.msra.mxu0 0.0
    %146 = vmatprep.subr.mxu0 0.0
    %147 = vmatpush1.msra.mxu0 0.0
    %148 = vmatprep.subr.mxu0 0.0
    %149 = vmatpush1.msra.mxu0 0.0
    %150 = vmatprep.subr.mxu0 0.0
    %151 = vmatpush1.msra.mxu0 0.0
    %152 = vmatprep.subr.mxu0 0.0
    %153 = vmatpush1.msra.mxu0 0.0
    %154 = vmatprep.subr.mxu0 0.0
    %155 = vmatpush1.msra.mxu0 0.0
    %156 = vmatprep.subr.mxu0 0.0
    %157 = vmatpush1.msra.mxu0 0.0
    %158 = vmatprep.mubr.f32.mxu0 0.0
    %159 = vmatmul.mubr.f32.gmra.mrb[0].mxu0 %v92
    %v160 = vpop.f32.mrb[0].mxu0
    %v161 = vadd.f32 %v88, %v160
    %v162 = vpop.f32.mrb[0].mxu0
    %163 = vdwg.mxu0
    %v164 = vmax.f32 %v161, 0.0
    %v165 = vld [vmem:[#allocation8] sm:$0xff]
    %v166 = vld [vmem:[#allocation8 + $0x8] sm:$0xff]
    %v167 = vld [vmem:[#allocation10] sm:$0x1]
    %v169 = vlaneseq
    %v170 = vshrl.u32 %v169, 7
    %v171 = vsub.s32 0, %v170
    %v172 = vrot.slane %v167, %v171
    %vm174 = vcmask 130048
    %v176 = vsel %vm174, %v164, 0
    %178 = vmatprep.subr.mxu0 0.0
    %179 = vmatpush1.msra.mxu0 %v165
    %180 = vmatprep.subr.mxu0 0.0
    %181 = vmatpush1.msra.mxu0 %v166
    %182 = vmatprep.subr.mxu0 0.0
    %183 = vmatpush1.msra.mxu0 0.0
    %184 = vmatprep.subr.mxu0 0.0
    %185 = vmatpush1.msra.mxu0 0.0
    %186 = vmatprep.subr.mxu0 0.0
    %187 = vmatpush1.msra.mxu0 0.0
    %188 = vmatprep.subr.mxu0 0.0
    %189 = vmatpush1.msra.mxu0 0.0
    %190 = vmatprep.subr.mxu0 0.0
    %191 = vmatpush1.msra.mxu0 0.0
    %192 = vmatprep.subr.mxu0 0.0
    %193 = vmatpush1.msra.mxu0 0.0
    %194 = vmatprep.subr.mxu0 0.0
    %195 = vmatpush1.msra.mxu0 0.0
    %196 = vmatprep.subr.mxu0 0.0
    %197 = vmatpush1.msra.mxu0 0.0
    %198 = vmatprep.subr.mxu0 0.0
    %199 = vmatpush1.msra.mxu0 0.0
    %200 = vmatprep.subr.mxu0 0.0
    %201 = vmatpush1.msra.mxu0 0.0
    %202 = vmatprep.subr.mxu0 0.0
    %203 = vmatpush1.msra.mxu0 0.0
    %204 = vmatprep.subr.mxu0 0.0
    %205 = vmatpush1.msra.mxu0 0.0
    %206 = vmatprep.subr.mxu0 0.0
    %207 = vmatpush1.msra.mxu0 0.0
    %208 = vmatprep.subr.mxu0 0.0
    %209 = vmatpush1.msra.mxu0 0.0
    %210 = vmatprep.subr.mxu0 0.0
    %211 = vmatpush1.msra.mxu0 0.0
    %212 = vmatprep.subr.mxu0 0.0
    %213 = vmatpush1.msra.mxu0 0.0
    %214 = vmatprep.subr.mxu0 0.0
    %215 = vmatpush1.msra.mxu0 0.0
    %216 = vmatprep.subr.mxu0 0.0
    %217 = vmatpush1.msra.mxu0 0.0
    %218 = vmatprep.subr.mxu0 0.0
    %219 = vmatpush1.msra.mxu0 0.0
    %220 = vmatprep.subr.mxu0 0.0
    %221 = vmatpush1.msra.mxu0 0.0
    %222 = vmatprep.subr.mxu0 0.0
    %223 = vmatpush1.msra.mxu0 0.0
    %224 = vmatprep.subr.mxu0 0.0
    %225 = vmatpush1.msra.mxu0 0.0
    %226 = vmatprep.subr.mxu0 0.0
    %227 = vmatpush1.msra.mxu0 0.0
    %228 = vmatprep.subr.mxu0 0.0
    %229 = vmatpush1.msra.mxu0 0.0
    %230 = vmatprep.subr.mxu0 0.0
    %231 = vmatpush1.msra.mxu0 0.0
    %232 = vmatprep.subr.mxu0 0.0
    %233 = vmatpush1.msra.mxu0 0.0
    %234 = vmatprep.subr.mxu0 0.0
    %235 = vmatpush1.msra.mxu0 0.0
    %236 = vmatprep.subr.mxu0 0.0
    %237 = vmatpush1.msra.mxu0 0.0
    %238 = vmatprep.subr.mxu0 0.0
    %239 = vmatpush1.msra.mxu0 0.0
    %240 = vmatprep.subr.mxu0 0.0
    %241 = vmatpush1.msra.mxu0 0.0
    %242 = vmatprep.mubr.f32.mxu0 0.0
    %243 = vmatmul.mubr.f32.gmra.mrb[0].mxu0 %v176
    %v244 = vpop.f32.mrb[0].mxu0
    %v245 = vadd.f32 %v172, %v244
    %v246 = vpop.f32.mrb[0].mxu0
    %247 = vdwg.mxu0
    %vm248 = vcmask 60416
    %249 = vst.msk [vmem:[#allocation11] sm:$0xf] %vm248, %v245
    // Predicated region
    $region42: #{simple_rl_model_forward.1} parent=1 // pred_check
      _
    $region43: #{simple_rl_model_forward.1} parent=1 // pred_check_branch
      %251 = sbr.rel (0) target = $region45
    $region44: #{simple_rl_model_forward.1} parent=1 // pred_region
      %s253 = ssub.s32 64, 64
      %254 = vsyncadd [#allocation4], %s253
      %s256 = sshll.u32 [#allocation11], 4
      %s257 = int_to_ptr.vmem [resolvable:$true] %s256
      %259 = dma.vmem_to_hbm [thread:$0]  %s257, 64, %s5, [#allocation4]
    $region45: #{simple_rl_model_forward.1} parent=1 // pred_fallthru
      _
    // Predicated region
    $region46: #{simple_rl_model_forward.1} parent=1 // pred_check
      _
    $region47: #{simple_rl_model_forward.1} parent=1 // pred_check_branch
      %261 = sbr.rel (0) target = $region49
    $region48: #{simple_rl_model_forward.1} parent=1 // pred_region
      %262 = dma.done [#allocation4], 64
    $region49: #{simple_rl_model_forward.1} parent=1 // pred_fallthru
      _
    %263 = vsyncpa [#allocation3], 1
    %264 = vsyncpa [#allocation6], 1
    %265 = vsyncpa [#allocation9], 1
    %266 = vsyncpa [#allocation4], 1

</llo_original>
